<compile_context>
chip_gen: v6e
topology: v6e:2x2x1
jax: 0.10.0
libtpu: 0.0.40
codegen_flags: <defaults>
</compile_context>

<pallas_src>
import functools
import math

import jax
import jax.numpy as jnp
from jax import lax
from jax.experimental import pallas as pl
from jax.experimental.pallas import tpu as pltpu

_LANE = 128
_MIB = 1024 * 1024
_ROWS_RESIDENT_MAX = 1024   # max rows kept resident when the N axis is tiled


def _round_up(a: int, b: int) -> int:
    return ((a + b - 1) // b) * b


def _sublane_multiple(dtype) -> int:
    """Sublane rounding of the second-minor dim (sub-32-bit packs along sublanes)."""
    return max(8, 32 // jnp.dtype(dtype).itemsize)


def _max_identity(dtype):
    """Identity element of `max` for `dtype` (used to mask ragged N tiles)."""
    dtype = jnp.dtype(dtype)
    if jnp.issubdtype(dtype, jnp.floating):
        return float("-inf")
    if jnp.issubdtype(dtype, jnp.integer):
        return int(jnp.iinfo(dtype).min)
    if dtype == jnp.bool_:
        return False
    raise NotImplementedError(f"MAC: unsupported dtype {dtype}")


@functools.lru_cache(maxsize=None)
def _budgets():
    """Per-generation (block_bytes, vmem_limit_bytes)."""
    vmem_phys = 128 * _MIB                      # v5e / v6e physical VMEM
    try:
        info = pltpu.get_tpu_info()
        vmem_phys = int(getattr(info, "vmem_capacity_bytes", vmem_phys))
    except Exception:
        vmem_phys = 64 * _MIB                   # conservative: assume v7x-class VMEM
    # 48 MiB scoped limit on v7x (64 MiB physical), 64 MiB on v5e/v6e (128 MiB).
    vmem_limit = max(32 * _MIB, min((vmem_phys * 3) // 4, 64 * _MIB))
    # 2 double-buffered input blocks + tiny output comfortably inside the limit.
    block_bytes = min(16 * _MIB, vmem_limit // 3)
    return block_bytes, vmem_limit


def _mac_rows_kernel(x_ref, o_ref):
    """Fast path: reduce the full (TR, N) slab to a lane-dense (1, TR) block."""
    o_ref[...] = jnp.max(x_ref[...], axis=-1)[None, :]


def _mac_acc_kernel(x_ref, o_ref, *, n_rem, fill):
    """Huge-N fallback: running max kept in the resident (1, TR) output block.

    n_rem = N % TN (0 if the last N tile is full). The ragged-tile mask is only
    emitted/executed for the last k step (pl.when guard) so full tiles stay
    pure max work.
    """
    k = pl.program_id(1)
    last = pl.num_programs(1) - 1

    @pl.when(k == 0)
    def _init():
        o_ref[...] = jnp.full_like(o_ref, fill)

    def _accumulate(mask_tail):
        x = x_ref[...]
        if mask_tail:
            col = lax.broadcasted_iota(jnp.int32, x.shape, x.ndim - 1)
            x = jnp.where(col < n_rem, x, jnp.asarray(fill, x.dtype))
        o_ref[...] = jnp.maximum(o_ref[...], jnp.max(x, axis=-1)[None, :])

    if n_rem:  # static: masking code only exists when the last tile is ragged
        @pl.when(k != last)
        def _full_tiles():
            _accumulate(False)

        @pl.when(k == last)
        def _ragged_tile():
            _accumulate(True)
    else:
        _accumulate(False)


def _mac_2d(x2: jax.Array, block_bytes: int, vmem_limit: int) -> jax.Array:
    """Max over axis -1 of a 2-D array (R, N) -> (R,)."""
    R, N = x2.shape
    dtype = x2.dtype
    itemsize = jnp.dtype(dtype).itemsize
    sub = _sublane_multiple(dtype)
    # Real VMEM bytes of one row inside a (tr, N) block: lane dim pads to 128.
    padded_row_bytes = _round_up(N, _LANE) * itemsize

    cost = pl.CostEstimate(flops=R * N, transcendentals=0,
                           bytes_accessed=R * N * itemsize + R * itemsize)

    def cparams(sem):
        return pltpu.CompilerParams(dimension_semantics=sem,
                                    vmem_limit_bytes=vmem_limit)

    whole_fits = _round_up(R, sub) * padded_row_bytes <= block_bytes
    rows_per_block = block_bytes // padded_row_bytes   # padding-aware row budget

    # ----------------- Fast path: full-N row blocks, no accumulator. -----------------
    if whole_fits or rows_per_block >= _LANE:
        if whole_fits and R < 2 * _LANE:
            tr = R                                  # tiny: one block, one grid step
        else:
            # Split rows into 2..8 "parallel" blocks (v7x megacore + DMA overlap),
            # capped so a double-buffered block stays inside the budget.
            target_splits = max(2, min(8, R // _LANE))
            tr = max(_LANE, _round_up(pl.cdiv(R, target_splits), _LANE))
            tr = min(tr, (rows_per_block // _LANE) * _LANE)
        grid = (pl.cdiv(R, tr),)
        out = pl.pallas_call(
            _mac_rows_kernel,
            out_shape=jax.ShapeDtypeStruct((1, R), dtype),
            grid_spec=pltpu.PrefetchScalarGridSpec(
                num_scalar_prefetch=0,
                grid=grid,
                in_specs=[pl.BlockSpec((tr, N), lambda i: (i, 0))],
                out_specs=pl.BlockSpec((1, tr), lambda i: (0, i)),
            ),
            compiler_params=cparams(("parallel",)),
            cost_estimate=cost,
        )(x2)
        return out[0]

    # --------------- Fallback: N is huge, tile the reduction axis too. ---------------
    tr = R if R <= _ROWS_RESIDENT_MAX else _LANE
    tr_pad = _round_up(tr, sub)                     # sublane-padded VMEM rows
    # Per-buffer budget such that triple-buffering stays within ~60% of the limit.
    per_buf = min(block_bytes, (vmem_limit * 6 // 10) // 3)
    tn_max = max(_LANE, ((per_buf // (tr_pad * itemsize)) // _LANE) * _LANE)
    n_chunks = pl.cdiv(N, tn_max)
    tn = _round_up(pl.cdiv(N, n_chunks), _LANE)     # balanced, lane-aligned chunks
    grid = (pl.cdiv(R, tr), pl.cdiv(N, tn))

    in_map = lambda i, k: (i, k)
    try:
        # Per-step compute is tiny -> keep one extra DMA in flight along the
        # (kept) reduction axis; per-buffer size above already accounts for 3x.
        in_spec = pl.BlockSpec((tr, tn), in_map, pipeline_mode=pl.Buffered(3))
    except TypeError:  # older JAX without BlockSpec(pipeline_mode=...)
        in_spec = pl.BlockSpec((tr, tn), in_map)

    kernel = functools.partial(_mac_acc_kernel, n_rem=N % tn,
                               fill=_max_identity(dtype))
    out = pl.pallas_call(
        kernel,
        out_shape=jax.ShapeDtypeStruct((1, R), dtype),
        grid_spec=pltpu.PrefetchScalarGridSpec(
            num_scalar_prefetch=0,
            grid=grid,
            in_specs=[in_spec],
            out_specs=pl.BlockSpec((1, tr), lambda i, k: (0, i)),
        ),
        compiler_params=cparams(("parallel", "arbitrary")),  # reduction axis last
        cost_estimate=cost,
    )(x2)
    return out[0]


def mac(x: jax.Array, *, block_bytes: int | None = None,
        vmem_limit_bytes: int | None = None) -> jax.Array:
    """torch.max(x, dim=-1, keepdim=False)[0] for an array of any rank >= 1."""
    auto_block, auto_vmem = _budgets()
    block_bytes = auto_block if block_bytes is None else block_bytes
    vmem_limit = auto_vmem if vmem_limit_bytes is None else vmem_limit_bytes
    lead = x.shape[:-1]
    n = x.shape[-1]
    r = math.prod(lead) if lead else 1
    out = _mac_2d(x.reshape(r, n), block_bytes, vmem_limit)   # (r,)
    return out.reshape(lead)


if __name__ == "__main__":
    # MAC has no parameters; only the input tensor matters.
    key = jax.random.PRNGKey(0)
    k1, k2, k3, k4, k5 = jax.random.split(key, 5)

    def _check(x, **kw):
        out = jax.block_until_ready(mac(x, **kw))
        ref = jnp.max(x, axis=-1)
        assert out.shape == ref.shape, (out.shape, ref.shape)
        assert out.dtype == ref.dtype, (out.dtype, ref.dtype)
        assert bool(jnp.array_equal(out, ref)), "Pallas MAC mismatch vs jnp.max"

    # 1) Primary case: small 4-D input reduced over the last axis (single block).
    _check(jax.random.normal(k1, (2, 4, 16, 16), dtype=jnp.float32))

    # 2) Multi-row-block fast path (forced small block budget): 2 parallel blocks.
    _check(jax.random.normal(k2, (2, 128, 128), dtype=jnp.float32),
           block_bytes=64 * 1024)

    # 3) Ragged row tail (R=300 is not a multiple of the 128-row block).
    _check(jax.random.normal(k2, (3, 100, 128), dtype=jnp.float32),
           block_bytes=64 * 1024)

    # 4) Row-split fast path with default budgets (R=1024 -> 8 parallel blocks).
    _check(jax.random.normal(k5, (2, 512, 192), dtype=jnp.float32))

    # 5) Huge-N fallback (forced): resident row-max over tiled N, ragged last N
    #    tile masked only on the last step, all-negative values so the -inf
    #    masking is actually exercised.
    _check(-jnp.abs(jax.random.normal(k3, (3, 5, 300), dtype=jnp.float32)) - 1.0,
           block_bytes=4 * 1024)

    # 6) bf16 (max is exact in any dtype).
    _check(jax.random.normal(k4, (2, 8, 256), dtype=jnp.bfloat16))

    print("KERNEL_OK")
</pallas_src>

<mosaic_0001>
module attributes {stable_mosaic.version = 11 : i64} {
  func.func @_mac_rows_kernel(%arg0: i32, %arg1: memref<128x16xf32, #tpu.memory_space<vmem>>, %arg2: memref<1x128xf32, #tpu.memory_space<vmem>>) attributes {dimension_semantics = [#tpu.dimension_semantics<parallel>], iteration_bounds = array<i64: 1>, scalar_prefetch = 0 : i64, scratch_operands = 0 : i64, tpu.core_type = #tpu.core_type<tc>, window_params = [{transform_indices = @transform_0, window_bounds = array<i64: 128, 16>}, {transform_indices = @transform_1, window_bounds = array<i64: 1, 128>}]} {
    %c0 = arith.constant 0 : index
    %c0_0 = arith.constant 0 : index
    %0 = vector.load %arg1[%c0, %c0_0] : memref<128x16xf32, #tpu.memory_space<vmem>>, vector<128x16xf32>
    %cst = arith.constant dense<0xFF800000> : vector<128xf32>
    %1 = vector.multi_reduction <maximumf>, %0, %cst [1] : vector<128x16xf32> to vector<128xf32>
    %2 = vector.shape_cast %1 : vector<128xf32> to vector<1x128xf32>
    %c0_1 = arith.constant 0 : index
    %c0_2 = arith.constant 0 : index
    %3 = vector.load %arg2[%c0_1, %c0_2] : memref<1x128xf32, #tpu.memory_space<vmem>>, vector<1x128xf32>
    tpu.vector_store %arg2[%c0_1, %c0_2], %2 {strides = array<i32>} : memref<1x128xf32, #tpu.memory_space<vmem>>, vector<1x128xf32>,
    return
  }
  func.func @transform_0(%arg0: i32) -> (i32, i32) {
    %c0_i32 = arith.constant 0 : i32
    %c0_i32_0 = arith.constant 0 : i32
    return %arg0, %c0_i32 : i32, i32
  }
  func.func @transform_1(%arg0: i32) -> (i32, i32) {
    %c0_i32 = arith.constant 0 : i32
    %c0_i32_0 = arith.constant 0 : i32
    return %c0_i32, %arg0 : i32, i32
  }
}

</mosaic_0001>

<llo_original>
// kernel: tpu_custom_call.1
$region0: #{tpu_custom_call.1}
  #allocation0 [shape = 'u32[]', space=smem, size = 0x4, offset = 0x4, fixed_abs, tag = 'smem constant byte address 0x4 - core index']
  #allocation1 [shape = 'u32[144,128]{1,0:T(1,128)}', space=vmem, size = 0x12000, scoped, tag = 'internal scratch']
  %s0 = inlined_call_operand.vmem [shape: f32[128,16], index: 0, kind: input, shape index: {}]
  %s1 = inlined_call_operand.hbm [shape: f32[1,128], index: 1, kind: output, shape index: {}]
  %s2 = sld [smem:[#allocation0]]
  $region14: #{tpu_custom_call.1} parent=0
    _
  %s4 = ssub.s32 1, %s2
  %s5 = scalar_select 0, %s4, %s2
  $region1: #{tpu_custom_call.1} parent=0
    #allocation2 [shape = 'u8[512]{0}', space=vmem, size = 0x400, scoped, tag = 'output window, operand 0, single buffered']
    #allocation3 [shape = 's32[1]{0}', space=sflag, size = 0x4, scoped, tag = 'scoped memory for tpu_custom_call.1']
    %6 = vsyncpa [#allocation3], 0
    // Predicated region
    $region2: #{tpu_custom_call.1} parent=1 // pred_check
      _
    $region3: #{tpu_custom_call.1} parent=1 // pred_check_branch
      %8 = sbr.rel (0) target = $region5
    $region4: #{tpu_custom_call.1} parent=1 // pred_region
      _
    $region5: #{tpu_custom_call.1} parent=1 // pred_fallthru
      _
    %v9 = vld [vmem:[%s0] sm:$0xff]
    %v10 = vld [vmem:[%s0 + $0x8] sm:$0xff]
    %v11 = vld [vmem:[%s0 + $0x10] sm:$0xff]
    %v12 = vld [vmem:[%s0 + $0x18] sm:$0xff]
    %v13 = vld [vmem:[%s0 + $0x20] sm:$0xff]
    %v14 = vld [vmem:[%s0 + $0x28] sm:$0xff]
    %v15 = vld [vmem:[%s0 + $0x30] sm:$0xff]
    %v16 = vld [vmem:[%s0 + $0x38] sm:$0xff]
    %v17 = vld [vmem:[%s0 + $0x40] sm:$0xff]
    %v18 = vld [vmem:[%s0 + $0x48] sm:$0xff]
    %v19 = vld [vmem:[%s0 + $0x50] sm:$0xff]
    %v20 = vld [vmem:[%s0 + $0x58] sm:$0xff]
    %v21 = vld [vmem:[%s0 + $0x60] sm:$0xff]
    %v22 = vld [vmem:[%s0 + $0x68] sm:$0xff]
    %v23 = vld [vmem:[%s0 + $0x70] sm:$0xff]
    %v24 = vld [vmem:[%s0 + $0x78] sm:$0xff]
    %vm25 = vcmask 130048
    %v26 = vsel %vm25, %v9, -inf
    %27 = vmax.xlane.f32.xlu0 %v26
    %v28 = vpop.xlane.xlu0 %27
    %v29 = vsel %vm25, %v10, -inf
    %30 = vmax.xlane.f32.xlu0 %v29
    %v31 = vpop.xlane.xlu0 %30
    %v32 = vsel %vm25, %v11, -inf
    %33 = vmax.xlane.f32.xlu0 %v32
    %v34 = vpop.xlane.xlu0 %33
    %v35 = vsel %vm25, %v12, -inf
    %36 = vmax.xlane.f32.xlu0 %v35
    %v37 = vpop.xlane.xlu0 %36
    %v38 = vsel %vm25, %v13, -inf
    %39 = vmax.xlane.f32.xlu0 %v38
    %v40 = vpop.xlane.xlu0 %39
    %v41 = vsel %vm25, %v14, -inf
    %42 = vmax.xlane.f32.xlu0 %v41
    %v43 = vpop.xlane.xlu0 %42
    %v44 = vsel %vm25, %v15, -inf
    %45 = vmax.xlane.f32.xlu0 %v44
    %v46 = vpop.xlane.xlu0 %45
    %v47 = vsel %vm25, %v16, -inf
    %48 = vmax.xlane.f32.xlu0 %v47
    %v49 = vpop.xlane.xlu0 %48
    %v50 = vsel %vm25, %v17, -inf
    %51 = vmax.xlane.f32.xlu0 %v50
    %v52 = vpop.xlane.xlu0 %51
    %v53 = vsel %vm25, %v18, -inf
    %54 = vmax.xlane.f32.xlu0 %v53
    %v55 = vpop.xlane.xlu0 %54
    %v56 = vsel %vm25, %v19, -inf
    %57 = vmax.xlane.f32.xlu0 %v56
    %v58 = vpop.xlane.xlu0 %57
    %v59 = vsel %vm25, %v20, -inf
    %60 = vmax.xlane.f32.xlu0 %v59
    %v61 = vpop.xlane.xlu0 %60
    %v62 = vsel %vm25, %v21, -inf
    %63 = vmax.xlane.f32.xlu0 %v62
    %v64 = vpop.xlane.xlu0 %63
    %v65 = vsel %vm25, %v22, -inf
    %66 = vmax.xlane.f32.xlu0 %v65
    %v67 = vpop.xlane.xlu0 %66
    %v68 = vsel %vm25, %v23, -inf
    %69 = vmax.xlane.f32.xlu0 %v68
    %v70 = vpop.xlane.xlu0 %69
    %v71 = vsel %vm25, %v24, -inf
    %72 = vmax.xlane.f32.xlu0 %v71
    %v73 = vpop.xlane.xlu0 %72
    %v90 = vlaneseq
    %v91 = vand.u32 %v90, 127
    %v92 = vlaneseq
    %v93 = vshrl.u32 %v92, 7
    %v94 = vsub.s32 %v91, %v93
    %v95 = vrot.slane %v28, %v94
    %v96 = vadd.s32 %v91, 4294967288
    %v97 = vlaneseq
    %v98 = vshrl.u32 %v97, 7
    %v99 = vsub.s32 %v96, %v98
    %v100 = vrot.slane %v31, %v99
    %vm101 = vcmask 130112
    %v102 = vsel %vm101, %v100, %v95
    %v103 = vadd.s32 %v91, 4294967280
    %v104 = vlaneseq
    %v105 = vshrl.u32 %v104, 7
    %v106 = vsub.s32 %v103, %v105
    %v107 = vrot.slane %v34, %v106
    %vm108 = vcmask 195712
    %v109 = vsel %vm108, %v107, %v102
    %v110 = vadd.s32 %v91, 4294967272
    %v111 = vlaneseq
    %v112 = vshrl.u32 %v111, 7
    %v113 = vsub.s32 %v110, %v112
    %v114 = vrot.slane %v37, %v113
    %vm115 = vcmask 261312
    %v116 = vsel %vm115, %v114, %v109
    %v117 = vadd.s32 %v91, 4294967264
    %v118 = vlaneseq
    %v119 = vshrl.u32 %v118, 7
    %v120 = vsub.s32 %v117, %v119
    %v121 = vrot.slane %v40, %v120
    %vm122 = vcmask 326912
    %v123 = vsel %vm122, %v121, %v116
    %v124 = vadd.s32 %v91, 4294967256
    %v125 = vlaneseq
    %v126 = vshrl.u32 %v125, 7
    %v127 = vsub.s32 %v124, %v126
    %v128 = vrot.slane %v43, %v127
    %vm129 = vcmask 392512
    %v130 = vsel %vm129, %v128, %v123
    %v131 = vadd.s32 %v91, 4294967248
    %v132 = vlaneseq
    %v133 = vshrl.u32 %v132, 7
    %v134 = vsub.s32 %v131, %v133
    %v135 = vrot.slane %v46, %v134
    %vm136 = vcmask 458112
    %v137 = vsel %vm136, %v135, %v130
    %v138 = vadd.s32 %v91, 4294967240
    %v139 = vlaneseq
    %v140 = vshrl.u32 %v139, 7
    %v141 = vsub.s32 %v138, %v140
    %v142 = vrot.slane %v49, %v141
    %vm143 = vcmask 523712
    %v144 = vsel %vm143, %v142, %v137
    %v145 = vadd.s32 %v91, 4294967232
    %v146 = vlaneseq
    %v147 = vshrl.u32 %v146, 7
    %v148 = vsub.s32 %v145, %v147
    %v149 = vrot.slane %v52, %v148
    %vm150 = vcmask 589312
    %v151 = vsel %vm150, %v149, %v144
    %v152 = vadd.s32 %v91, 4294967224
    %v153 = vlaneseq
    %v154 = vshrl.u32 %v153, 7
    %v155 = vsub.s32 %v152, %v154
    %v156 = vrot.slane %v55, %v155
    %vm157 = vcmask 654912
    %v158 = vsel %vm157, %v156, %v151
    %v159 = vadd.s32 %v91, 4294967216
    %v160 = vlaneseq
    %v161 = vshrl.u32 %v160, 7
    %v162 = vsub.s32 %v159, %v161
    %v163 = vrot.slane %v58, %v162
    %vm164 = vcmask 720512
    %v165 = vsel %vm164, %v163, %v158
    %v166 = vadd.s32 %v91, 4294967208
    %v167 = vlaneseq
    %v168 = vshrl.u32 %v167, 7
    %v169 = vsub.s32 %v166, %v168
    %v170 = vrot.slane %v61, %v169
    %vm171 = vcmask 786112
    %v172 = vsel %vm171, %v170, %v165
    %v173 = vadd.s32 %v91, 4294967200
    %v174 = vlaneseq
    %v175 = vshrl.u32 %v174, 7
    %v176 = vsub.s32 %v173, %v175
    %v177 = vrot.slane %v64, %v176
    %vm178 = vcmask 851712
    %v179 = vsel %vm178, %v177, %v172
    %v180 = vadd.s32 %v91, 4294967192
    %v181 = vlaneseq
    %v182 = vshrl.u32 %v181, 7
    %v183 = vsub.s32 %v180, %v182
    %v184 = vrot.slane %v67, %v183
    %vm185 = vcmask 917312
    %v186 = vsel %vm185, %v184, %v179
    %v187 = vadd.s32 %v91, 4294967184
    %v188 = vlaneseq
    %v189 = vshrl.u32 %v188, 7
    %v190 = vsub.s32 %v187, %v189
    %v191 = vrot.slane %v70, %v190
    %vm192 = vcmask 982912
    %v193 = vsel %vm192, %v191, %v186
    %v194 = vadd.s32 %v91, 4294967176
    %v195 = vlaneseq
    %v196 = vshrl.u32 %v195, 7
    %v197 = vsub.s32 %v194, %v196
    %v198 = vrot.slane %v73, %v197
    %vm199 = vcmask 1048512
    %v200 = vsel %vm199, %v198, %v193
    %202 = vst [vmem:[#allocation2] sm:$0x1] %v200
    // Predicated region
    $region6: #{tpu_custom_call.1} parent=1 // pred_check
      _
    $region7: #{tpu_custom_call.1} parent=1 // pred_check_branch
      %204 = sbr.rel (0) target = $region9
    $region8: #{tpu_custom_call.1} parent=1 // pred_region
      %s206 = ssub.s32 16, 16
      %207 = vsyncadd [#allocation3], %s206
      %s209 = sshll.u32 [#allocation2], 4
      %s210 = int_to_ptr.vmem [resolvable:$true] %s209
      %212 = dma.vmem_to_hbm [thread:$0]  %s210, 16, %s1, [#allocation3]
    $region9: #{tpu_custom_call.1} parent=1 // pred_fallthru
      _
    // Predicated region
    $region10: #{tpu_custom_call.1} parent=1 // pred_check
      _
    $region11: #{tpu_custom_call.1} parent=1 // pred_check_branch
      %214 = sbr.rel (0) target = $region13
    $region12: #{tpu_custom_call.1} parent=1 // pred_region
      %215 = dma.done [#allocation3], 16
    $region13: #{tpu_custom_call.1} parent=1 // pred_fallthru
      _
    %216 = vsyncpa [#allocation3], 1

</llo_original>
